<compile_context>
chip_gen: v7x
topology: tpu7x:2x2x1
jax: 0.10.0
libtpu: 0.0.40
codegen_flags: <defaults>
</compile_context>

<pallas_src>
import numpy as np
import jax
import jax.numpy as jnp
from jax.experimental import pallas as pl
from jax.experimental.pallas import tpu as pltpu

N = 8    # neurons of the previous layer (n_in == n_out of the ReLU)
M = 16   # number of input variables tracked by the back-substituted W's

_VSPEC = pl.BlockSpec(memory_space=pltpu.MemorySpace.VMEM)

# column indices of the packed (N, 10) vector-output slab
(_PREV_UB, _PREV_LB, _B_UP, _B_LO, _UB, _LB,
 _B_UP2, _B_LO2, _COEF_U, _COEF_L) = range(10)
_NVEC = 10


# --------------------------------------------------------------------------
# Fused kernel:
#   1) back-substitution step (prev_layer.prev is None):
#        ub = (W>=0)*W @ ub + (W<0)*W @ lb + b   (symmetrically for lb)
#        best_ub = min(prev.ub, ub); best_lb = max(prev.lb, lb)
#   2) ReLU relaxation: per-row masks (neg/pos/cross), per-row scaling of
#      W_upper/W_lower, new biases/bounds and the diagonals of W_*2.
# --------------------------------------------------------------------------
def _fused_relu_kernel(bounds_row_ref, vecs_col_ref, wu2p_ref, wl2p_ref,
                       wup_ref, wlp_ref, wu_out, wl_out, vec_out):
    # ---------------- back-substitution (exact f32 on VPU/XLU) ------------
    br = bounds_row_ref[...]              # (2, N): rows = [ub, lb] of prev layer
    ub_r = br[0:1, :]                     # (1, N)
    lb_r = br[1:2, :]                     # (1, N)

    vc = vecs_col_ref[...]                # (N, 8): cols = [ub, lb, bu2, bl2, bu, bl, 0, 0]
    ub0     = vc[:, 0:1]
    lb0     = vc[:, 1:2]
    bu2     = vc[:, 2:3]
    bl2     = vc[:, 3:4]
    bu_prev = vc[:, 4:5]
    bl_prev = vc[:, 5:6]

    wu2 = wu2p_ref[...]                   # (N, N)
    wl2 = wl2p_ref[...]                   # (N, N)
    wu2_pos = jnp.where(wu2 >= 0.0, wu2, 0.0)
    wu2_neg = wu2 - wu2_pos
    wl2_pos = jnp.where(wl2 >= 0.0, wl2, 0.0)
    wl2_neg = wl2 - wl2_pos

    # masked mat-vec as broadcast-multiply + lane reduction (exact f32)
    new_ub = jnp.sum(wu2_pos * ub_r + wu2_neg * lb_r, axis=1, keepdims=True) + bu2
    new_lb = jnp.sum(wl2_pos * lb_r + wl2_neg * ub_r, axis=1, keepdims=True) + bl2

    ub = jnp.minimum(ub0, new_ub)         # (N, 1)
    lb = jnp.maximum(lb0, new_lb)         # (N, 1)

    # ---------------- ReLU relaxation --------------------------------------
    pos = lb >= 0.0
    neg = ub <= 0.0
    cross = jnp.logical_not(jnp.logical_or(pos, neg))

    # alpha init (first call): 1 where ub > -lb else 0, clamped to [0, 1]
    alpha = jnp.where(ub > -lb, 1.0, 0.0)

    denom = jnp.where(cross, ub - lb, 1.0)          # safe denominator
    a = jnp.where(cross, ub / denom, 0.0)           # slope of upper relaxation
    b = jnp.where(cross, -lb * a, 0.0)              # intercept of upper relaxation

    coef_u = jnp.where(pos, 1.0, a)                                # diag of W_upper2
    coef_l = jnp.where(pos, 1.0, jnp.where(cross, alpha, 0.0))     # diag of W_lower2

    # hot path: per-row scaling of the back-substituted weight matrices
    wu_out[...] = coef_u * wup_ref[...]
    wl_out[...] = coef_l * wlp_ref[...]

    # packed lane-dense vector output slab (single write-back DMA)
    vec_out[:, _PREV_UB:_PREV_UB + 1] = ub
    vec_out[:, _PREV_LB:_PREV_LB + 1] = lb
    vec_out[:, _B_UP:_B_UP + 1] = jnp.where(pos, bu_prev,
                                            jnp.where(cross, a * bu_prev + b, 0.0))
    vec_out[:, _B_LO:_B_LO + 1] = jnp.where(pos, bl_prev, 0.0)
    vec_out[:, _UB:_UB + 1] = jnp.where(neg, 0.0, ub)
    vec_out[:, _LB:_LB + 1] = jnp.where(pos, lb, 0.0)
    vec_out[:, _B_UP2:_B_UP2 + 1] = b
    vec_out[:, _B_LO2:_B_LO2 + 1] = jnp.zeros_like(b)
    vec_out[:, _COEF_U:_COEF_U + 1] = coef_u
    vec_out[:, _COEF_L:_COEF_L + 1] = coef_l


# --------------------------------------------------------------------------
# Wrapper reproducing AbstractReLU.forward(prev_layer) with prev_layer.prev == None
# --------------------------------------------------------------------------
def abstract_relu_forward(prev):
    n, m = prev['W_upper'].shape
    f32 = jnp.float32
    flat = lambda v: jnp.asarray(v, f32).reshape(n)

    ub0 = flat(prev['ub'])
    lb0 = flat(prev['lb'])
    zeros = jnp.zeros(n, f32)

    # packed, de-duplicated inputs (pure relayout, no compute)
    bounds_row = jnp.stack([ub0, lb0], axis=0)                       # (2, N)
    vecs_col = jnp.stack([ub0, lb0,
                          flat(prev['b_upper2']), flat(prev['b_lower2']),
                          flat(prev['b_upper']), flat(prev['b_lower']),
                          zeros, zeros], axis=1)                     # (N, 8)

    wu_out, wl_out, vec_out = pl.pallas_call(
        _fused_relu_kernel,
        out_shape=(jax.ShapeDtypeStruct((n, m), f32),      # W_upper
                   jax.ShapeDtypeStruct((n, m), f32),      # W_lower
                   jax.ShapeDtypeStruct((n, _NVEC), f32)), # packed vectors
        in_specs=[_VSPEC] * 6,
        out_specs=(_VSPEC, _VSPEC, _VSPEC),
    )(bounds_row, vecs_col,
      jnp.asarray(prev['W_upper2'], f32), jnp.asarray(prev['W_lower2'], f32),
      jnp.asarray(prev['W_upper'], f32), jnp.asarray(prev['W_lower'], f32))

    # diagonal matrices are O(N) information: built lazily with a trivial XLA op
    coef_u = vec_out[:, _COEF_U]
    coef_l = vec_out[:, _COEF_L]
    eye = jnp.eye(n, dtype=f32)

    return dict(
        prev_ub=vec_out[:, _PREV_UB], prev_lb=vec_out[:, _PREV_LB],
        W_upper=wu_out, W_lower=wl_out,
        b_upper=vec_out[:, _B_UP], b_lower=vec_out[:, _B_LO],
        ub=vec_out[:, _UB], lb=vec_out[:, _LB],
        W_upper2=coef_u[:, None] * eye,
        W_lower2=coef_l[:, None] * eye,
        b_upper2=vec_out[:, _B_UP2], b_lower2=vec_out[:, _B_LO2],
        n_in=n, n_out=n,            # bookkeeping glue (no compute)
    )


# --------------------------------------------------------------------------
# Pure-numpy reference mirroring the PyTorch code (for correctness check)
# --------------------------------------------------------------------------
def reference_forward(prev):
    p = {k: np.asarray(v, dtype=np.float32) for k, v in prev.items()}
    wu2, wl2 = p['W_upper2'], p['W_lower2']
    bu2, bl2 = p['b_upper2'], p['b_lower2']
    ub0, lb0 = p['ub'], p['lb']
    mu, ml = wu2 >= 0, wl2 >= 0
    ub_bs = (mu * wu2) @ ub0 + (~mu * wu2) @ lb0 + bu2
    lb_bs = (ml * wl2) @ lb0 + (~ml * wl2) @ ub0 + bl2
    ub = np.minimum(ub0, ub_bs)
    lb = np.maximum(lb0, lb_bs)

    n, m = p['W_upper'].shape
    neg = ub <= 0.0
    pos = lb >= 0.0
    cross = ~(neg | pos)

    W_upper = np.zeros((n, m), np.float32); b_upper = np.zeros(n, np.float32)
    W_lower = np.zeros((n, m), np.float32); b_lower = np.zeros(n, np.float32)
    ub_new = np.zeros(n, np.float32); lb_new = np.zeros(n, np.float32)
    W_upper2 = np.zeros((n, n), np.float32); W_lower2 = np.zeros((n, n), np.float32)
    b_upper2 = np.zeros(n, np.float32); b_lower2 = np.zeros(n, np.float32)

    ub_new[pos] = ub[pos]; lb_new[pos] = lb[pos]
    W_upper[pos] = p['W_upper'][pos]; b_upper[pos] = p['b_upper'][pos]
    W_lower[pos] = p['W_lower'][pos]; b_lower[pos] = p['b_lower'][pos]
    arr = np.zeros(n, np.float32); arr[pos] = 1.0
    W_upper2[pos] = np.diag(arr)[pos]; W_lower2[pos] = np.diag(arr)[pos]

    if cross.any():
        alpha = np.clip((ub > -lb).astype(np.float32), 0.0, 1.0)
        a = ub[cross] / (ub[cross] - lb[cross])
        b = -lb[cross] * a
        W_upper[cross] = a[:, None] * p['W_upper'][cross]
        b_upper[cross] = a * p['b_upper'][cross] + b
        W_lower[cross] = alpha[cross][:, None] * p['W_lower'][cross]
        ub_new[cross] = ub[cross]
        a2 = np.zeros(n, np.float32); a2[cross] = a
        alpha2 = np.zeros(n, np.float32); alpha2[cross] = alpha[cross]
        W_upper2[cross] = np.diag(a2)[cross]
        b_upper2[cross] = b
        W_lower2[cross] = np.diag(alpha2)[cross]
        b_lower2[cross] = 0.0

    return dict(prev_ub=ub, prev_lb=lb, W_upper=W_upper, W_lower=W_lower,
                b_upper=b_upper, b_lower=b_lower, ub=ub_new, lb=lb_new,
                W_upper2=W_upper2, W_lower2=W_lower2,
                b_upper2=b_upper2, b_lower2=b_lower2)


if __name__ == "__main__":
    key = jax.random.PRNGKey(0)
    k1, k2, k3, k4, k5, k6 = jax.random.split(key, 6)

    # Deterministic synthetic state of the previous abstract layer
    # (acts as an affine layer with its own concrete bounds; prev.prev == None).
    W = jax.random.normal(k1, (N, M), dtype=jnp.float32) * 0.5
    b = jax.random.normal(k2, (N,), dtype=jnp.float32) * 0.1
    W2 = jax.random.normal(k3, (N, N), dtype=jnp.float32) * 0.5
    b2 = jax.random.normal(k4, (N,), dtype=jnp.float32) * 0.1
    center = jax.random.normal(k5, (N,), dtype=jnp.float32)
    radius = jnp.abs(jax.random.normal(k6, (N,), dtype=jnp.float32)) * 0.5 + 0.1

    prev_layer = dict(
        W_upper=W, W_lower=W, b_upper=b, b_lower=b,
        W_upper2=W2, W_lower2=W2, b_upper2=b2, b_lower2=b2,
        ub=center + radius, lb=center - radius,
    )

    out = abstract_relu_forward(prev_layer)
    for v in out.values():
        if isinstance(v, jnp.ndarray):
            jax.block_until_ready(v)

    ref = reference_forward(prev_layer)
    for name, ref_val in ref.items():
        np.testing.assert_allclose(np.asarray(out[name]), ref_val,
                                   rtol=1e-4, atol=1e-4, err_msg=name)

    print("KERNEL_OK")
</pallas_src>

<mosaic_0001>
module attributes {stable_mosaic.version = 11 : i64} {
  func.func @_fused_relu_kernel(%arg0: memref<2x8xf32, #tpu.memory_space<vmem>>, %arg1: memref<8x8xf32, #tpu.memory_space<vmem>>, %arg2: memref<8x8xf32, #tpu.memory_space<vmem>>, %arg3: memref<8x8xf32, #tpu.memory_space<vmem>>, %arg4: memref<8x16xf32, #tpu.memory_space<vmem>>, %arg5: memref<8x16xf32, #tpu.memory_space<vmem>>, %arg6: memref<8x16xf32, #tpu.memory_space<vmem>>, %arg7: memref<8x16xf32, #tpu.memory_space<vmem>>, %arg8: memref<8x10xf32, #tpu.memory_space<vmem>>) attributes {dimension_semantics = [], scalar_prefetch = 0 : i64, scratch_operands = 0 : i64, tpu.core_type = #tpu.core_type<tc>} {
    %c0 = arith.constant 0 : index
    %c0_0 = arith.constant 0 : index
    %0 = vector.load %arg0[%c0, %c0_0] : memref<2x8xf32, #tpu.memory_space<vmem>>, vector<2x8xf32>
    %1 = vector.extract_strided_slice %0 {offsets = [0, 0], sizes = [1, 8], strides = [1, 1]} : vector<2x8xf32> to vector<1x8xf32>
    %2 = vector.extract_strided_slice %0 {offsets = [1, 0], sizes = [1, 8], strides = [1, 1]} : vector<2x8xf32> to vector<1x8xf32>
    %c0_1 = arith.constant 0 : index
    %c0_2 = arith.constant 0 : index
    %3 = vector.load %arg1[%c0_1, %c0_2] : memref<8x8xf32, #tpu.memory_space<vmem>>, vector<8x8xf32>
    %4 = vector.extract_strided_slice %3 {offsets = [0, 0], sizes = [8, 1], strides = [1, 1]} : vector<8x8xf32> to vector<8x1xf32>
    %5 = vector.extract_strided_slice %3 {offsets = [0, 1], sizes = [8, 1], strides = [1, 1]} : vector<8x8xf32> to vector<8x1xf32>
    %6 = vector.extract_strided_slice %3 {offsets = [0, 2], sizes = [8, 1], strides = [1, 1]} : vector<8x8xf32> to vector<8x1xf32>
    %7 = vector.extract_strided_slice %3 {offsets = [0, 3], sizes = [8, 1], strides = [1, 1]} : vector<8x8xf32> to vector<8x1xf32>
    %8 = vector.extract_strided_slice %3 {offsets = [0, 4], sizes = [8, 1], strides = [1, 1]} : vector<8x8xf32> to vector<8x1xf32>
    %9 = vector.extract_strided_slice %3 {offsets = [0, 5], sizes = [8, 1], strides = [1, 1]} : vector<8x8xf32> to vector<8x1xf32>
    %c0_3 = arith.constant 0 : index
    %c0_4 = arith.constant 0 : index
    %10 = vector.load %arg2[%c0_3, %c0_4] : memref<8x8xf32, #tpu.memory_space<vmem>>, vector<8x8xf32>
    %c0_5 = arith.constant 0 : index
    %c0_6 = arith.constant 0 : index
    %11 = vector.load %arg3[%c0_5, %c0_6] : memref<8x8xf32, #tpu.memory_space<vmem>>, vector<8x8xf32>
    %cst = arith.constant 0.000000e+00 : f32
    %12 = vector.broadcast %cst : f32 to vector<8x8xf32>
    %13 = arith.cmpf oge, %10, %12 : vector<8x8xf32>
    %cst_7 = arith.constant 0.000000e+00 : f32
    %14 = vector.broadcast %cst_7 : f32 to vector<8x8xf32>
    %15 = arith.select %13, %10, %14 : vector<8x8xi1>, vector<8x8xf32>
    %16 = arith.subf %10, %15 : vector<8x8xf32>
    %cst_8 = arith.constant 0.000000e+00 : f32
    %17 = vector.broadcast %cst_8 : f32 to vector<8x8xf32>
    %18 = arith.cmpf oge, %11, %17 : vector<8x8xf32>
    %cst_9 = arith.constant 0.000000e+00 : f32
    %19 = vector.broadcast %cst_9 : f32 to vector<8x8xf32>
    %20 = arith.select %18, %11, %19 : vector<8x8xi1>, vector<8x8xf32>
    %21 = arith.subf %11, %20 : vector<8x8xf32>
    %22 = vector.broadcast %1 : vector<1x8xf32> to vector<8x8xf32>
    %23 = arith.mulf %15, %22 : vector<8x8xf32>
    %24 = vector.broadcast %2 : vector<1x8xf32> to vector<8x8xf32>
    %25 = arith.mulf %16, %24 : vector<8x8xf32>
    %26 = arith.addf %23, %25 : vector<8x8xf32>
    %cst_10 = arith.constant dense<0.000000e+00> : vector<8xf32>
    %27 = vector.multi_reduction <add>, %26, %cst_10 [1] : vector<8x8xf32> to vector<8xf32>
    %28 = vector.shape_cast %27 : vector<8xf32> to vector<8x1xf32>
    %29 = arith.addf %28, %6 : vector<8x1xf32>
    %30 = vector.broadcast %2 : vector<1x8xf32> to vector<8x8xf32>
    %31 = arith.mulf %20, %30 : vector<8x8xf32>
    %32 = vector.broadcast %1 : vector<1x8xf32> to vector<8x8xf32>
    %33 = arith.mulf %21, %32 : vector<8x8xf32>
    %34 = arith.addf %31, %33 : vector<8x8xf32>
    %cst_11 = arith.constant dense<0.000000e+00> : vector<8xf32>
    %35 = vector.multi_reduction <add>, %34, %cst_11 [1] : vector<8x8xf32> to vector<8xf32>
    %36 = vector.shape_cast %35 : vector<8xf32> to vector<8x1xf32>
    %37 = arith.addf %36, %7 : vector<8x1xf32>
    %38 = arith.minimumf %4, %29 : vector<8x1xf32>
    %39 = arith.maximumf %5, %37 : vector<8x1xf32>
    %cst_12 = arith.constant 0.000000e+00 : f32
    %40 = vector.broadcast %cst_12 : f32 to vector<8x1xf32>
    %41 = arith.cmpf oge, %39, %40 : vector<8x1xf32>
    %cst_13 = arith.constant 0.000000e+00 : f32
    %42 = vector.broadcast %cst_13 : f32 to vector<8x1xf32>
    %43 = arith.cmpf ole, %38, %42 : vector<8x1xf32>
    %44 = arith.ori %41, %43 : vector<8x1xi1>
    %cst_14 = arith.constant dense<true> : vector<8x1xi1>
    %45 = arith.xori %44, %cst_14 : vector<8x1xi1>
    %cst_15 = arith.constant 0.000000e+00 : f32
    %46 = vector.broadcast %cst_15 : f32 to vector<8x1xf32>
    %47 = arith.subf %46, %39 : vector<8x1xf32>
    %48 = arith.cmpf ogt, %38, %47 : vector<8x1xf32>
    %cst_16 = arith.constant 1.000000e+00 : f32
    %cst_17 = arith.constant 0.000000e+00 : f32
    %49 = vector.broadcast %cst_16 : f32 to vector<8x1xf32>
    %50 = vector.broadcast %cst_17 : f32 to vector<8x1xf32>
    %51 = arith.select %48, %49, %50 : vector<8x1xi1>, vector<8x1xf32>
    %52 = arith.subf %38, %39 : vector<8x1xf32>
    %cst_18 = arith.constant 1.000000e+00 : f32
    %53 = vector.broadcast %cst_18 : f32 to vector<8x1xf32>
    %54 = arith.select %45, %52, %53 : vector<8x1xi1>, vector<8x1xf32>
    %55 = arith.divf %38, %54 : vector<8x1xf32>
    %cst_19 = arith.constant 0.000000e+00 : f32
    %56 = vector.broadcast %cst_19 : f32 to vector<8x1xf32>
    %57 = arith.select %45, %55, %56 : vector<8x1xi1>, vector<8x1xf32>
    %cst_20 = arith.constant 0.000000e+00 : f32
    %58 = vector.broadcast %cst_20 : f32 to vector<8x1xf32>
    %59 = arith.subf %58, %39 : vector<8x1xf32>
    %60 = arith.mulf %59, %57 : vector<8x1xf32>
    %cst_21 = arith.constant 0.000000e+00 : f32
    %61 = vector.broadcast %cst_21 : f32 to vector<8x1xf32>
    %62 = arith.select %45, %60, %61 : vector<8x1xi1>, vector<8x1xf32>
    %cst_22 = arith.constant 1.000000e+00 : f32
    %63 = vector.broadcast %cst_22 : f32 to vector<8x1xf32>
    %64 = arith.select %41, %63, %57 : vector<8x1xi1>, vector<8x1xf32>
    %cst_23 = arith.constant 0.000000e+00 : f32
    %65 = vector.broadcast %cst_23 : f32 to vector<8x1xf32>
    %66 = arith.select %45, %51, %65 : vector<8x1xi1>, vector<8x1xf32>
    %cst_24 = arith.constant 1.000000e+00 : f32
    %67 = vector.broadcast %cst_24 : f32 to vector<8x1xf32>
    %68 = arith.select %41, %67, %66 : vector<8x1xi1>, vector<8x1xf32>
    %c0_25 = arith.constant 0 : index
    %c0_26 = arith.constant 0 : index
    %69 = vector.load %arg4[%c0_25, %c0_26] : memref<8x16xf32, #tpu.memory_space<vmem>>, vector<8x16xf32>
    %70 = vector.broadcast %64 : vector<8x1xf32> to vector<8x16xf32>
    %71 = arith.mulf %70, %69 : vector<8x16xf32>
    %c0_27 = arith.constant 0 : index
    %c0_28 = arith.constant 0 : index
    %72 = vector.load %arg6[%c0_27, %c0_28] : memref<8x16xf32, #tpu.memory_space<vmem>>, vector<8x16xf32>
    tpu.vector_store %arg6[%c0_27, %c0_28], %71 {strides = array<i32>} : memref<8x16xf32, #tpu.memory_space<vmem>>, vector<8x16xf32>,
    %c0_29 = arith.constant 0 : index
    %c0_30 = arith.constant 0 : index
    %73 = vector.load %arg5[%c0_29, %c0_30] : memref<8x16xf32, #tpu.memory_space<vmem>>, vector<8x16xf32>
    %74 = vector.broadcast %68 : vector<8x1xf32> to vector<8x16xf32>
    %75 = arith.mulf %74, %73 : vector<8x16xf32>
    %c0_31 = arith.constant 0 : index
    %c0_32 = arith.constant 0 : index
    %76 = vector.load %arg7[%c0_31, %c0_32] : memref<8x16xf32, #tpu.memory_space<vmem>>, vector<8x16xf32>
    tpu.vector_store %arg7[%c0_31, %c0_32], %75 {strides = array<i32>} : memref<8x16xf32, #tpu.memory_space<vmem>>, vector<8x16xf32>,
    %c0_33 = arith.constant 0 : index
    %c0_34 = arith.constant 0 : index
    %77 = vector.load %arg8[%c0_33, %c0_34] : memref<8x10xf32, #tpu.memory_space<vmem>>, vector<8x1xf32>
    tpu.vector_store %arg8[%c0_33, %c0_34], %38 {strides = array<i32>} : memref<8x10xf32, #tpu.memory_space<vmem>>, vector<8x1xf32>,
    %c0_35 = arith.constant 0 : index
    %c1 = arith.constant 1 : index
    %78 = vector.load %arg8[%c0_35, %c1] : memref<8x10xf32, #tpu.memory_space<vmem>>, vector<8x1xf32>
    tpu.vector_store %arg8[%c0_35, %c1], %39 {strides = array<i32>} : memref<8x10xf32, #tpu.memory_space<vmem>>, vector<8x1xf32>,
    %79 = arith.mulf %57, %8 : vector<8x1xf32>
    %80 = arith.addf %79, %62 : vector<8x1xf32>
    %cst_36 = arith.constant 0.000000e+00 : f32
    %81 = vector.broadcast %cst_36 : f32 to vector<8x1xf32>
    %82 = arith.select %45, %80, %81 : vector<8x1xi1>, vector<8x1xf32>
    %83 = arith.select %41, %8, %82 : vector<8x1xi1>, vector<8x1xf32>
    %c0_37 = arith.constant 0 : index
    %c2 = arith.constant 2 : index
    %84 = vector.load %arg8[%c0_37, %c2] : memref<8x10xf32, #tpu.memory_space<vmem>>, vector<8x1xf32>
    tpu.vector_store %arg8[%c0_37, %c2], %83 {strides = array<i32>} : memref<8x10xf32, #tpu.memory_space<vmem>>, vector<8x1xf32>,
    %cst_38 = arith.constant 0.000000e+00 : f32
    %85 = vector.broadcast %cst_38 : f32 to vector<8x1xf32>
    %86 = arith.select %41, %9, %85 : vector<8x1xi1>, vector<8x1xf32>
    %c0_39 = arith.constant 0 : index
    %c3 = arith.constant 3 : index
    %87 = vector.load %arg8[%c0_39, %c3] : memref<8x10xf32, #tpu.memory_space<vmem>>, vector<8x1xf32>
    tpu.vector_store %arg8[%c0_39, %c3], %86 {strides = array<i32>} : memref<8x10xf32, #tpu.memory_space<vmem>>, vector<8x1xf32>,
    %cst_40 = arith.constant 0.000000e+00 : f32
    %88 = vector.broadcast %cst_40 : f32 to vector<8x1xf32>
    %89 = arith.select %43, %88, %38 : vector<8x1xi1>, vector<8x1xf32>
    %c0_41 = arith.constant 0 : index
    %c4 = arith.constant 4 : index
    %90 = vector.load %arg8[%c0_41, %c4] : memref<8x10xf32, #tpu.memory_space<vmem>>, vector<8x1xf32>
    tpu.vector_store %arg8[%c0_41, %c4], %89 {strides = array<i32>} : memref<8x10xf32, #tpu.memory_space<vmem>>, vector<8x1xf32>,
    %cst_42 = arith.constant 0.000000e+00 : f32
    %91 = vector.broadcast %cst_42 : f32 to vector<8x1xf32>
    %92 = arith.select %41, %39, %91 : vector<8x1xi1>, vector<8x1xf32>
    %c0_43 = arith.constant 0 : index
    %c5 = arith.constant 5 : index
    %93 = vector.load %arg8[%c0_43, %c5] : memref<8x10xf32, #tpu.memory_space<vmem>>, vector<8x1xf32>
    tpu.vector_store %arg8[%c0_43, %c5], %92 {strides = array<i32>} : memref<8x10xf32, #tpu.memory_space<vmem>>, vector<8x1xf32>,
    %c0_44 = arith.constant 0 : index
    %c6 = arith.constant 6 : index
    %94 = vector.load %arg8[%c0_44, %c6] : memref<8x10xf32, #tpu.memory_space<vmem>>, vector<8x1xf32>
    tpu.vector_store %arg8[%c0_44, %c6], %62 {strides = array<i32>} : memref<8x10xf32, #tpu.memory_space<vmem>>, vector<8x1xf32>,
    %cst_45 = arith.constant 0.000000e+00 : f32
    %95 = vector.broadcast %cst_45 : f32 to vector<8x1xf32>
    %c0_46 = arith.constant 0 : index
    %c7 = arith.constant 7 : index
    %96 = vector.load %arg8[%c0_46, %c7] : memref<8x10xf32, #tpu.memory_space<vmem>>, vector<8x1xf32>
    tpu.vector_store %arg8[%c0_46, %c7], %95 {strides = array<i32>} : memref<8x10xf32, #tpu.memory_space<vmem>>, vector<8x1xf32>,
    %c0_47 = arith.constant 0 : index
    %c8 = arith.constant 8 : index
    %97 = vector.load %arg8[%c0_47, %c8] : memref<8x10xf32, #tpu.memory_space<vmem>>, vector<8x1xf32>
    tpu.vector_store %arg8[%c0_47, %c8], %64 {strides = array<i32>} : memref<8x10xf32, #tpu.memory_space<vmem>>, vector<8x1xf32>,
    %c0_48 = arith.constant 0 : index
    %c9 = arith.constant 9 : index
    %98 = vector.load %arg8[%c0_48, %c9] : memref<8x10xf32, #tpu.memory_space<vmem>>, vector<8x1xf32>
    tpu.vector_store %arg8[%c0_48, %c9], %68 {strides = array<i32>} : memref<8x10xf32, #tpu.memory_space<vmem>>, vector<8x1xf32>,
    return
  }
}

</mosaic_0001>

<llo_original>
// kernel: tpu_custom_call.1
$region0: #{tpu_custom_call.1}
  #allocation0 [shape = 'u32[]', space=smem, size = 0x4, offset = 0x4, fixed_abs, tag = 'smem constant byte address 0x4 - core index']
  #allocation1 [shape = 'u32[144,128]{1,0:T(1,128)}', space=vmem, size = 0x12000, scoped, tag = 'internal scratch']
  %s0 = inlined_call_operand.hbm [shape: f32[2,8], index: 0, kind: input, shape index: {}]
  %s1 = inlined_call_operand.hbm [shape: f32[8,8], index: 1, kind: input, shape index: {}]
  %s2 = inlined_call_operand.hbm [shape: f32[8,8], index: 2, kind: input, shape index: {}]
  %s3 = inlined_call_operand.vmem [shape: f32[8,8], index: 3, kind: input, shape index: {}]
  %s4 = inlined_call_operand.hbm [shape: f32[8,16], index: 4, kind: input, shape index: {}]
  %s5 = inlined_call_operand.vmem [shape: f32[8,16], index: 5, kind: input, shape index: {}]
  %s6 = inlined_call_operand.hbm [shape: f32[8,16], index: 6, kind: output, shape index: {0}]
  %s7 = inlined_call_operand.hbm [shape: f32[8,16], index: 7, kind: output, shape index: {1}]
  %s8 = inlined_call_operand.hbm [shape: f32[8,10], index: 8, kind: output, shape index: {2}]
  %9 = xla_tuple %s6, %s7, %s8
  %s10 = sld [smem:[#allocation0]]
  $region66: #{tpu_custom_call.1} parent=0
    _
  %s12 = ssub.s32 1, %s10
  %s13 = scalar_select 0, %s12, %s10
  $region1: #{tpu_custom_call.1} parent=0
    #allocation2 [shape = 'u8[1024]{0}', space=vmem, size = 0x400, scoped, tag = 'input window, operand 0, single buffered']
    #allocation3 [shape = 's32[1]{0}', space=sflag, size = 0x4, scoped, tag = 'scoped memory for tpu_custom_call.1']
    #allocation4 [shape = 's32[1]{0}', space=sflag, size = 0x4, scoped, tag = 'scoped memory for tpu_custom_call.1']
    #allocation5 [shape = 'u8[4096]{0}', space=vmem, size = 0x1000, scoped, tag = 'input window, operand 1, single buffered']
    #allocation6 [shape = 's32[1]{0}', space=sflag, size = 0x4, scoped, tag = 'scoped memory for tpu_custom_call.1']
    #allocation7 [shape = 'u8[4096]{0}', space=vmem, size = 0x1000, scoped, tag = 'input window, operand 2, single buffered']
    #allocation8 [shape = 'u8[4096]{0}', space=vmem, size = 0x1000, scoped, tag = 'input window, operand 4, single buffered']
    #allocation9 [shape = 's32[1]{0}', space=sflag, size = 0x4, scoped, tag = 'scoped memory for tpu_custom_call.1']
    #allocation10 [shape = 'u8[4096]{0}', space=vmem, size = 0x1000, scoped, tag = 'output window, operand 0, single buffered']
    #allocation11 [shape = 'u8[4096]{0}', space=vmem, size = 0x1000, scoped, tag = 'output window, operand 1, single buffered']
    #allocation12 [shape = 's32[1]{0}', space=sflag, size = 0x4, scoped, tag = 'scoped memory for tpu_custom_call.1']
    #allocation13 [shape = 'u8[4096]{0}', space=vmem, size = 0x1000, scoped, tag = 'output window, operand 2, single buffered']
    %14 = vsyncpa [#allocation3], 0
    %15 = vsyncpa [#allocation6], 0
    %16 = vsyncpa [#allocation9], 0
    %17 = vsyncpa [#allocation4], 0
    %18 = vsyncpa [#allocation12], 0
    // Predicated region
    $region2: #{tpu_custom_call.1} parent=1 // pred_check
      _
    $region3: #{tpu_custom_call.1} parent=1 // pred_check_branch
      %20 = sbr.rel (0) target = $region5
    $region4: #{tpu_custom_call.1} parent=1 // pred_region
      %s22 = ssub.s32 32, 32
      %23 = vsyncadd [#allocation3], %s22
      %s25 = sshll.u32 [#allocation2], 4
      %s26 = int_to_ptr.vmem [resolvable:$true] %s25
      %28 = dma.hbm_to_vmem [thread:$0]  %s0, 32, %s26, [#allocation3]
    $region5: #{tpu_custom_call.1} parent=1 // pred_fallthru
      _
    // Predicated region
    $region6: #{tpu_custom_call.1} parent=1 // pred_check
      _
    $region7: #{tpu_custom_call.1} parent=1 // pred_check_branch
      %30 = sbr.rel (0) target = $region9
    $region8: #{tpu_custom_call.1} parent=1 // pred_region
      %s32 = ssub.s32 128, 128
      %33 = vsyncadd [#allocation6], %s32
      %s35 = sshll.u32 [#allocation5], 4
      %s36 = int_to_ptr.vmem [resolvable:$true] %s35
      %38 = dma.hbm_to_vmem [thread:$0]  %s1, 128, %s36, [#allocation6]
    $region9: #{tpu_custom_call.1} parent=1 // pred_fallthru
      _
    // Predicated region
    $region10: #{tpu_custom_call.1} parent=1 // pred_check
      _
    $region11: #{tpu_custom_call.1} parent=1 // pred_check_branch
      %40 = sbr.rel (0) target = $region13
    $region12: #{tpu_custom_call.1} parent=1 // pred_region
      %s42 = ssub.s32 128, 128
      %43 = vsyncadd [#allocation6], %s42
      %s45 = sshll.u32 [#allocation7], 4
      %s46 = int_to_ptr.vmem [resolvable:$true] %s45
      %48 = dma.hbm_to_vmem [thread:$0]  %s2, 128, %s46, [#allocation6]
    $region13: #{tpu_custom_call.1} parent=1 // pred_fallthru
      _
    // Predicated region
    $region14: #{tpu_custom_call.1} parent=1 // pred_check
      _
    $region15: #{tpu_custom_call.1} parent=1 // pred_check_branch
      %50 = sbr.rel (0) target = $region17
    $region16: #{tpu_custom_call.1} parent=1 // pred_region
      _
    $region17: #{tpu_custom_call.1} parent=1 // pred_fallthru
      _
    // Predicated region
    $region18: #{tpu_custom_call.1} parent=1 // pred_check
      _
    $region19: #{tpu_custom_call.1} parent=1 // pred_check_branch
      %52 = sbr.rel (0) target = $region21
    $region20: #{tpu_custom_call.1} parent=1 // pred_region
      %s54 = ssub.s32 128, 128
      %55 = vsyncadd [#allocation9], %s54
      %s57 = sshll.u32 [#allocation8], 4
      %s58 = int_to_ptr.vmem [resolvable:$true] %s57
      %60 = dma.hbm_to_vmem [thread:$0]  %s4, 128, %s58, [#allocation9]
    $region21: #{tpu_custom_call.1} parent=1 // pred_fallthru
      _
    // Predicated region
    $region22: #{tpu_custom_call.1} parent=1 // pred_check
      _
    $region23: #{tpu_custom_call.1} parent=1 // pred_check_branch
      %62 = sbr.rel (0) target = $region25
    $region24: #{tpu_custom_call.1} parent=1 // pred_region
      _
    $region25: #{tpu_custom_call.1} parent=1 // pred_fallthru
      _
    // Predicated region
    $region26: #{tpu_custom_call.1} parent=1 // pred_check
      _
    $region27: #{tpu_custom_call.1} parent=1 // pred_check_branch
      %64 = sbr.rel (0) target = $region29
    $region28: #{tpu_custom_call.1} parent=1 // pred_region
      %65 = dma.done [#allocation3], 32
    $region29: #{tpu_custom_call.1} parent=1 // pred_fallthru
      _
    // Predicated region
    $region30: #{tpu_custom_call.1} parent=1 // pred_check
      _
    $region31: #{tpu_custom_call.1} parent=1 // pred_check_branch
      %67 = sbr.rel (0) target = $region33
    $region32: #{tpu_custom_call.1} parent=1 // pred_region
      %68 = dma.done [#allocation6], 128
    $region33: #{tpu_custom_call.1} parent=1 // pred_fallthru
      _
    // Predicated region
    $region34: #{tpu_custom_call.1} parent=1 // pred_check
      _
    $region35: #{tpu_custom_call.1} parent=1 // pred_check_branch
      %70 = sbr.rel (0) target = $region37
    $region36: #{tpu_custom_call.1} parent=1 // pred_region
      %71 = dma.done [#allocation6], 128
    $region37: #{tpu_custom_call.1} parent=1 // pred_fallthru
      _
    // Predicated region
    $region38: #{tpu_custom_call.1} parent=1 // pred_check
      _
    $region39: #{tpu_custom_call.1} parent=1 // pred_check_branch
      %73 = sbr.rel (0) target = $region41
    $region40: #{tpu_custom_call.1} parent=1 // pred_region
      %74 = dma.done [#allocation9], 128
    $region41: #{tpu_custom_call.1} parent=1 // pred_fallthru
      _
    %v75 = vld [vmem:[#allocation2] sm:$0x3]
    %v76 = vld [vmem:[#allocation5] sm:$0xff]
    %v77 = vld [vmem:[#allocation7] sm:$0xff]
    %v78 = vld [vmem:[%s3] sm:$0xff]
    %vm79 = vcmp.ge.f32.partialorder %v77, 0.0
    %v80 = vsel %vm79, %v77, 0.0
    %v81 = vsub.f32 %v77, %v80
    %vm82 = vcmp.ge.f32.partialorder %v78, 0.0
    %v83 = vsel %vm82, %v78, 0.0
    %v84 = vsub.f32 %v78, %v83
    %v85 = vlaneseq
    %v86 = vshrl.u32 %v85, 7
    %v87 = vsub.s32 0, %v86
    %v88 = vrot.slane %v75, %v87
    %v89 = vmul.f32 %v80, %v88
    %v90 = vlaneseq
    %v91 = vshrl.u32 %v90, 7
    %v92 = vsub.s32 1, %v91
    %v93 = vrot.slane %v75, %v92
    %v94 = vmul.f32 %v81, %v93
    %v95 = vadd.f32 %v89, %v94
    %vm96 = vcmask 64512
    %v97 = vsel %vm96, %v95, 0.0
    %98 = vadd.xlane.f32.xlu0 %v97
    %v99 = vpop.xlane.xlu0 %98
    %v100 = vadd.f32 %v99, %v76
    %v101 = vmul.f32 %v83, %v93
    %v102 = vmul.f32 %v84, %v88
    %v103 = vadd.f32 %v101, %v102
    %v104 = vsel %vm96, %v103, 0.0
    %105 = vadd.xlane.f32.xlu0 %v104
    %v106 = vpop.xlane.xlu0 %105
    %v107 = vadd.f32 %v106, %v76
    %109 = vrot.lane.b32.xlu0 %v100, 126
    %v110 = vpop.permute.xlu0 %109
    %v112 = vmin.f32 %v76, %v110
    %114 = vrot.lane.b32.xlu0 %v107, 126
    %v115 = vpop.permute.xlu0 %114
    %v117 = vmax.f32 %v76, %v115
    %vm118 = vcmp.ge.f32.partialorder %v117, 0.0
    %vm119 = vcmp.le.f32.partialorder %v112, 0.0
    %v120 = vsel %vm119, 1, 0
    %121 = vrot.lane.b32.xlu0 %v120, 1
    %v122 = vpop.permute.xlu0 %121
    %vm123 = vcmp.ne.s32.totalorder %v122, 0
    %vm124 = vmor %vm118, %vm123
    %vm125 = vmxor %vm124, 1
    %v126 = vsub.f32 0.0, %v117
    %128 = vrot.lane.b32.xlu0 %v126, 127
    %v129 = vpop.permute.xlu0 %128
    %vm131 = vcmp.gt.f32.partialorder %v112, %v129
    %v132 = vsel %vm131, 1.0, 0.0
    %134 = vrot.lane.b32.xlu0 %v117, 127
    %v135 = vpop.permute.xlu0 %134
    %v137 = vsub.f32 %v112, %v135
    %139 = vrot.lane.b32.xlu0 %v137, 1
    %v140 = vpop.permute.xlu0 %139
    %v142 = vsel %vm125, %v140, 1.0
    %144 = vrot.lane.b32.xlu0 %v142, 127
    %v145 = vpop.permute.xlu0 %144
    %v147 = vrcp.pop %v145
    %v148 = vmul.f32 %v112, %v147
    %150 = vrot.lane.b32.xlu0 %v148, 1
    %v151 = vpop.permute.xlu0 %150
    %v153 = vsel %vm125, %v151, 0.0
    %v154 = vmul.f32 %v126, %v153
    %v155 = vsel %vm125, %v154, 0.0
    %v156 = vsel %vm118, 1.0, %v153
    %158 = vrot.lane.b32.xlu0 %v132, 1
    %v159 = vpop.permute.xlu0 %158
    %v161 = vsel %vm125, %v159, 0.0
    %v162 = vsel %vm118, 1.0, %v161
    %v163 = vld [vmem:[#allocation8] sm:$0xff]
    %165 = vset.pattern.permute.xlu0 1
    %166 = vperm.xlu0 %165, %v156
    %v167 = vpop.permute.xlu0 %166
    %v169 = vmul.f32 %v167, %v163
    %vm170 = vcmask 130048
    %171 = vst.msk [vmem:[#allocation10] sm:$0xff] %vm170, %v169
    %v172 = vld [vmem:[%s5] sm:$0xff]
    %174 = vset.pattern.permute.xlu0 1
    %175 = vperm.xlu0 %174, %v162
    %v176 = vpop.permute.xlu0 %175
    %v178 = vmul.f32 %v176, %v172
    %179 = vst.msk [vmem:[#allocation11] sm:$0xff] %vm170, %v178
    %vm180 = vcmask 7168
    %181 = vst.msk [vmem:[#allocation13] sm:$0xff] %vm180, %v112
    %vm182 = vcmask 15368
    %183 = vst.msk [vmem:[#allocation13] sm:$0xff] %vm182, %v117
    %185 = vrot.lane.b32.xlu0 %v76, 125
    %v186 = vpop.permute.xlu0 %185
    %v188 = vmul.f32 %v153, %v186
    %v189 = vadd.f32 %v188, %v155
    %v190 = vsel %vm125, %v189, 0.0
    %v191 = vsel %vm118, %v186, %v190
    %193 = vrot.lane.b32.xlu0 %v191, 1
    %v194 = vpop.permute.xlu0 %193
    %vm196 = vcmask 23568
    %197 = vst.msk [vmem:[#allocation13] sm:$0xff] %vm196, %v194
    %198 = vrot.lane.b32.xlu0 %v76, 124
    %v199 = vpop.permute.xlu0 %198
    %v201 = vsel %vm118, %v199, 0.0
    %203 = vrot.lane.b32.xlu0 %v201, 2
    %v204 = vpop.permute.xlu0 %203
    %vm206 = vcmask 31768
    %207 = vst.msk [vmem:[#allocation13] sm:$0xff] %vm206, %v204
    %v208 = vsel %vm119, 0.0, %v112
    %210 = vrot.lane.b32.xlu0 %v208, 4
    %v211 = vpop.permute.xlu0 %210
    %vm213 = vcmask 39968
    %214 = vst.msk [vmem:[#allocation13] sm:$0xff] %vm213, %v211
    %v215 = vsel %vm118, %v117, 0.0
    %217 = vrot.lane.b32.xlu0 %v215, 4
    %v218 = vpop.permute.xlu0 %217
    %vm220 = vcmask 48168
    %221 = vst.msk [vmem:[#allocation13] sm:$0xff] %vm220, %v218
    %223 = vrot.lane.b32.xlu0 %v155, 5
    %v224 = vpop.permute.xlu0 %223
    %vm226 = vcmask 56368
    %227 = vst.msk [vmem:[#allocation13] sm:$0xff] %vm226, %v224
    %vm228 = vcmask 64568
    %229 = vst.msk [vmem:[#allocation13] sm:$0xff] %vm228, 0.0
    %230 = vrot.lane.b32.xlu0 %v156, 7
    %v231 = vpop.permute.xlu0 %230
    %vm233 = vcmask 72768
    %234 = vst.msk [vmem:[#allocation13] sm:$0xff] %vm233, %v231
    %235 = vrot.lane.b32.xlu0 %v162, 8
    %v236 = vpop.permute.xlu0 %235
    %vm238 = vcmask 80968
    %239 = vst.msk [vmem:[#allocation13] sm:$0xff] %vm238, %v236
    // Predicated region
    $region42: #{tpu_custom_call.1} parent=1 // pred_check
      _
    $region43: #{tpu_custom_call.1} parent=1 // pred_check_branch
      %241 = sbr.rel (0) target = $region45
    $region44: #{tpu_custom_call.1} parent=1 // pred_region
      %s243 = ssub.s32 128, 128
      %244 = vsyncadd [#allocation4], %s243
      %s246 = sshll.u32 [#allocation10], 4
      %s247 = int_to_ptr.vmem [resolvable:$true] %s246
      %249 = dma.vmem_to_hbm [thread:$0]  %s247, 128, %s6, [#allocation4]
    $region45: #{tpu_custom_call.1} parent=1 // pred_fallthru
      _
    // Predicated region
    $region46: #{tpu_custom_call.1} parent=1 // pred_check
      _
    $region47: #{tpu_custom_call.1} parent=1 // pred_check_branch
      %251 = sbr.rel (0) target = $region49
    $region48: #{tpu_custom_call.1} parent=1 // pred_region
      %s253 = ssub.s32 128, 128
      %254 = vsyncadd [#allocation12], %s253
      %s256 = sshll.u32 [#allocation11], 4
      %s257 = int_to_ptr.vmem [resolvable:$true] %s256
      %259 = dma.vmem_to_hbm [thread:$0]  %s257, 128, %s7, [#allocation12]
    $region49: #{tpu_custom_call.1} parent=1 // pred_fallthru
      _
    // Predicated region
    $region50: #{tpu_custom_call.1} parent=1 // pred_check
      _
    $region51: #{tpu_custom_call.1} parent=1 // pred_check_branch
      %261 = sbr.rel (0) target = $region53
    $region52: #{tpu_custom_call.1} parent=1 // pred_region
      %s263 = ssub.s32 128, 128
      %264 = vsyncadd [#allocation12], %s263
      %s266 = sshll.u32 [#allocation13], 4
      %s267 = int_to_ptr.vmem [resolvable:$true] %s266
      %269 = dma.vmem_to_hbm [thread:$0]  %s267, 128, %s8, [#allocation12]
    $region53: #{tpu_custom_call.1} parent=1 // pred_fallthru
      _
    // Predicated region
    $region54: #{tpu_custom_call.1} parent=1 // pred_check
      _
    $region55: #{tpu_custom_call.1} parent=1 // pred_check_branch
      %271 = sbr.rel (0) target = $region57
    $region56: #{tpu_custom_call.1} parent=1 // pred_region
      %272 = dma.done [#allocation4], 128
    $region57: #{tpu_custom_call.1} parent=1 // pred_fallthru
      _
    // Predicated region
    $region58: #{tpu_custom_call.1} parent=1 // pred_check
      _
    $region59: #{tpu_custom_call.1} parent=1 // pred_check_branch
      %274 = sbr.rel (0) target = $region61
    $region60: #{tpu_custom_call.1} parent=1 // pred_region
      %275 = dma.done [#allocation12], 128
    $region61: #{tpu_custom_call.1} parent=1 // pred_fallthru
      _
    // Predicated region
    $region62: #{tpu_custom_call.1} parent=1 // pred_check
      _
    $region63: #{tpu_custom_call.1} parent=1 // pred_check_branch
      %277 = sbr.rel (0) target = $region65
    $region64: #{tpu_custom_call.1} parent=1 // pred_region
      %278 = dma.done [#allocation12], 128
    $region65: #{tpu_custom_call.1} parent=1 // pred_fallthru
      _
    %279 = vsyncpa [#allocation3], 1
    %280 = vsyncpa [#allocation6], 1
    %281 = vsyncpa [#allocation9], 1
    %282 = vsyncpa [#allocation4], 1
    %283 = vsyncpa [#allocation12], 1

</llo_original>
